<compile_context>
chip_gen: v7x
topology: tpu7x:2x2x1
jax: 0.10.0
libtpu: 0.0.40
codegen_flags: <defaults>
</compile_context>

<pallas_src>
import numpy as np
import jax
import jax.numpy as jnp
from jax.experimental import pallas as pl
from jax.experimental.pallas import tpu as pltpu

EMBED_DIM = 16
HIDDEN_DIM = 32
OUTPUT_DIM = 8
NUM_HANDMADE = 4
MAX_USER_TWEETS = 100   # hard-coded "100" in the PyTorch module

MEANS = np.array([1.0901, 0.0135, 0.8929, 2.8], dtype=np.float32)
STDS = np.array([17.6291, 0.1156, 0.3092, 1.9421], dtype=np.float32)


def _round_up(x, m):
    return ((x + m - 1) // m) * m


def _choose_tile_n(num_tweets):
    # >= 2 "parallel" grid tiles whenever possible so both v7x TensorCores get
    # work, capped at 256 so each tile still amortizes the fixed per-step cost
    # on single-TC v5e/v6e; tiles must be multiples of 8 sublanes.
    half = _round_up(max(1, -(-num_tweets // 2)), 8)
    return int(min(256, half))


def _vmem_budget_bytes(T, tile_n, H, E, O):
    lane, f32 = 128, 4
    x_block = T * tile_n * max(E, lane) * f32        # x block is lane-padded in VMEM
    gx = T * tile_n * 4 * H * f32                    # precomputed x-gates scratch
    state = 3 * tile_n * lane * f32                  # h / c / last scratches
    small = 2 * tile_n * max(O, lane) * f32 + 4 * H * (E + H + 1) * f32
    est = 2 * x_block + gx + state + small + (2 << 20)   # double-buffered input + slack
    # Raise the scoped default (16 MiB on v5e, 32 MiB on v6e/v7x) but never ask
    # for more than v7x's 64 MiB physical VMEM.
    return int(min(64 * 2 ** 20, max(32 * 2 ** 20, est)))


# ----------------------------------------------------------------------------
# Fused kernel: single-layer LSTM over a padded, length-sorted batch tile,
# capturing the hidden state at the last *valid* time step of every sequence,
# then applying the recurrent half of the final Linear in the epilogue.  The
# handmade half (+ bias) arrives precomputed as `add_ref`.
# ----------------------------------------------------------------------------
def lstm_linear_kernel(tile_len_ref,                      # SMEM (n_tiles,) scalar prefetch
                       x_ref, lens_ref, w_ih_ref, w_hh_ref, b_ref,
                       lin_wh_ref, add_ref,
                       out_ref,
                       gx_scr, h_scr, c_scr, last_scr):
    T, Nt, E = x_ref.shape
    H = h_scr.shape[1]
    G = 4 * H

    # ---- input projection for every time step: one MXU call, bias folded in ----
    x_all = x_ref[...].reshape(T * Nt, E)                 # Nt % 8 == 0 -> layout-safe merge
    gx = jnp.dot(x_all, w_ih_ref[...],
                 preferred_element_type=jnp.float32) + b_ref[...]
    gx_scr[...] = gx.reshape(T, Nt, G)

    h_scr[...] = jnp.zeros_like(h_scr)
    c_scr[...] = jnp.zeros_like(c_scr)
    last_scr[...] = jnp.zeros_like(last_scr)

    # loop-invariant values hoisted out of the serial recurrence
    lane = jax.lax.broadcasted_iota(jnp.int32, (Nt, G), 1)
    g_band = (lane >= 2 * H) & (lane < 3 * H)             # tanh band (g gate)
    lens_b = jnp.broadcast_to(lens_ref[...], (Nt, H))     # hoisted (no per-step broadcast)

    # Serial recurrence: ONE matmul + ONE full-tile tanh per step.  The i/f/o
    # gate columns of W_ih / W_hh / bias were pre-scaled by 0.5 in the wrapper,
    # so their sigmoids come out of the same tanh: sigmoid(x) = 0.5*(1+tanh(x/2)).
    # The loop is bounded by THIS tile's maximum sequence length.
    @pl.loop(0, tile_len_ref[pl.program_id(0)])
    def _step(t):
        gates = (jnp.dot(h_scr[...], w_hh_ref[...],
                         preferred_element_type=jnp.float32)
                 + gx_scr[t])                             # (Nt, 4H)
        th = jnp.tanh(gates)                              # single EUP pass over the tile
        act = jnp.where(g_band, th, 0.5 * th + 0.5)       # i/f/o: sigmoid, g: tanh
        i_g = act[:, 0:H]
        f_g = act[:, H:2 * H]
        g_g = act[:, 2 * H:3 * H]
        o_g = act[:, 3 * H:4 * H]
        c_new = f_g * c_scr[...] + i_g * g_g
        h_new = o_g * jnp.tanh(c_new)
        c_scr[...] = c_new
        h_scr[...] = h_new
        # capture h at the last valid step of each sequence
        last_scr[...] = jnp.where(lens_b == t + 1, h_new, last_scr[...])

    # ---- fused recurrent half of the final Linear; handmade half precomputed ----
    out_ref[...] = (jnp.dot(last_scr[...], lin_wh_ref[...],
                            preferred_element_type=jnp.float32)
                    + add_ref[...])


def lstm_linear_features(x_tme, lens, tile_max_len, w_ih_t, w_hh_t, bias_row,
                         lin_wh, add_rows, tile_n, vmem_limit_bytes):
    """x_tme: (T, Np, E) f32 time-major, length-sorted rows, Np % tile_n == 0.
    Returns (Np, O): fused LSTM + Linear output per kernel (length-sorted) row."""
    T, Np, E = x_tme.shape
    H = w_hh_t.shape[0]
    O = lin_wh.shape[1]
    grid = (Np // tile_n,)
    # TODO(synk): at production scale (long T / thousands of tweets) stream x
    # through HBM with memory_space=pl.ANY + make_async_copy (or emit_pipeline
    # over a time-chunk axis) instead of one whole-(T, tile_n, E) block, to
    # respect v7x's 64 MiB VMEM.
    return pl.pallas_call(
        lstm_linear_kernel,
        out_shape=jax.ShapeDtypeStruct((Np, O), jnp.float32),
        grid_spec=pltpu.PrefetchScalarGridSpec(
            num_scalar_prefetch=1,
            grid=grid,
            in_specs=[
                pl.BlockSpec((T, tile_n, E), lambda n, tl: (0, n, 0)),
                pl.BlockSpec((tile_n, 1), lambda n, tl: (n, 0)),
                pl.BlockSpec((E, 4 * H), lambda n, tl: (0, 0)),
                pl.BlockSpec((H, 4 * H), lambda n, tl: (0, 0)),
                pl.BlockSpec((1, 4 * H), lambda n, tl: (0, 0)),
                pl.BlockSpec((H, O), lambda n, tl: (0, 0)),
                pl.BlockSpec((tile_n, O), lambda n, tl: (n, 0)),
            ],
            out_specs=pl.BlockSpec((tile_n, O), lambda n, tl: (n, 0)),
            scratch_shapes=[
                pltpu.VMEM((T, tile_n, 4 * H), jnp.float32),   # precomputed x-gates
                pltpu.VMEM((tile_n, H), jnp.float32),          # h
                pltpu.VMEM((tile_n, H), jnp.float32),          # c
                pltpu.VMEM((tile_n, H), jnp.float32),          # h at last valid step
            ]),
        compiler_params=pltpu.CompilerParams(
            dimension_semantics=("parallel",),
            vmem_limit_bytes=vmem_limit_bytes),
    )(tile_max_len, x_tme, lens, w_ih_t, w_hh_t, bias_row, lin_wh, add_rows)


# ----------------------------------------------------------------------------
# Full forward (glue in plain JAX, hot path in one fused Pallas kernel)
# ----------------------------------------------------------------------------
def tweet_feature_extractor_forward(x_padded, lengths, handmade_raw,
                                    tweets_per_user, params):
    """x_padded: (num_tweets, T, E) zero-padded embedded tweets (original order).
    lengths: python list of per-tweet lengths. handmade_raw: (num_tweets, 4)."""
    num_tweets, T, _ = x_padded.shape
    H, O = HIDDEN_DIM, OUTPUT_DIM

    # the module applies sorted_indices twice; effective gather is q = p[p]
    p = np.array(sorted(range(num_tweets), key=lambda i: lengths[i], reverse=True))
    inv_p = np.argsort(p)

    tile_n = _choose_tile_n(num_tweets)
    n_pad = _round_up(num_tweets, tile_n)
    n_tiles = n_pad // tile_n

    # Kernel rows are length-sorted (kernel row k <-> original tweet p[k]) so
    # each grid tile can bound its serial loop by its own maximum length.
    lens_sorted = np.zeros((n_pad,), np.int32)
    lens_sorted[:num_tweets] = np.asarray(lengths, np.int32)[p]
    tile_max_len = lens_sorted.reshape(n_tiles, tile_n).max(axis=1).astype(np.int32)

    x_sorted = x_padded[jnp.asarray(p)]                         # (num_tweets, T, E)
    x_tme = jnp.transpose(x_sorted, (1, 0, 2))                  # time-major (T, N, E)
    x_tme = jnp.pad(x_tme, ((0, 0), (0, n_pad - num_tweets), (0, 0)))
    lens_j = jnp.asarray(lens_sorted.reshape(n_pad, 1))

    # fold the sigmoid-from-tanh 0.5 pre-scale into the i/f/o gate columns
    # (PyTorch gate order along 4H is [i, f, g, o]; the g band is untouched)
    gate_scale = np.ones((4 * H,), np.float32)
    gate_scale[:2 * H] = 0.5          # i, f
    gate_scale[3 * H:] = 0.5          # o
    gate_scale = jnp.asarray(gate_scale)
    w_ih_t = params["w_ih"].T * gate_scale                      # (E, 4H)
    w_hh_t = params["w_hh"].T * gate_scale                      # (H, 4H)
    bias_row = ((params["b_ih"] + params["b_hh"]) * gate_scale).reshape(1, 4 * H)

    # Final Linear split: the recurrent half stays fused in the kernel; the
    # handmade half + bias is precomputed here (plain XLA) and enters the
    # kernel as one additive (Np, O) input.
    lin_w = params["lin_w"]                                     # (O, H+4)
    lin_wh = lin_w[:, :H].T                                     # (H, O)
    lin_wf = lin_w[:, H:].T                                     # (4, O)
    lin_b = params["lin_b"].reshape(1, O)
    hand = (handmade_raw.astype(jnp.float32) - jnp.asarray(MEANS)) / jnp.asarray(STDS)
    hand_lin = hand @ lin_wf + lin_b                            # (num_tweets, O)
    # kernel row k holds tweet p[k]; gathering the output by p must pair
    # last[q[j]] with hand_lin[j], so feed hand_lin permuted by inv(p).
    add_rows = jnp.pad(hand_lin[jnp.asarray(inv_p)],
                       ((0, n_pad - num_tweets), (0, 0)))

    vmem_limit = _vmem_budget_bytes(T, tile_n, H, EMBED_DIM, O)

    y = lstm_linear_features(x_tme, lens_j, jnp.asarray(tile_max_len),
                             w_ih_t, w_hh_t, bias_row, lin_wh, add_rows,
                             tile_n, vmem_limit)                # (n_pad, O)

    # module's final tweet-row order: out[j] = y_sorted[p[j]]
    y_real = y[jnp.asarray(p)]

    # per-user padding to 100 rows: a zero feature row through the Linear is
    # exactly the bias, so pad rows never touch the kernel.
    pad_rows = jnp.broadcast_to(lin_b, (MAX_USER_TWEETS, O))
    rows, off = [], 0
    for n in tweets_per_user:
        rows.append(y_real[off:off + n])
        off += n
        if n != MAX_USER_TWEETS:
            rows.append(pad_rows[:MAX_USER_TWEETS - n])
    out = jnp.concatenate(rows, axis=0)                         # (num_users*100, O)
    return out.reshape(len(tweets_per_user), -1, O)


# ----------------------------------------------------------------------------
# Pure-JAX reference (same math, no Pallas) for a correctness check.
# Matmuls run at Precision.HIGHEST so the reference is the accurate side.
# ----------------------------------------------------------------------------
def reference_forward(x_padded, lengths, handmade_raw, tweets_per_user, params):
    num_tweets, T, _ = x_padded.shape
    H = HIDDEN_DIM
    hp = jax.lax.Precision.HIGHEST
    lens_j = jnp.array(lengths, dtype=jnp.int32)
    W_ih, W_hh = params["w_ih"].T, params["w_hh"].T
    bb = params["b_ih"] + params["b_hh"]
    h = jnp.zeros((num_tweets, H)); c = jnp.zeros((num_tweets, H))
    last = jnp.zeros((num_tweets, H))
    for t in range(T):
        g = (jnp.dot(x_padded[:, t, :], W_ih, precision=hp)
             + jnp.dot(h, W_hh, precision=hp) + bb)
        i_g = jax.nn.sigmoid(g[:, :H]); f_g = jax.nn.sigmoid(g[:, H:2 * H])
        g_g = jnp.tanh(g[:, 2 * H:3 * H]); o_g = jax.nn.sigmoid(g[:, 3 * H:])
        c = f_g * c + i_g * g_g
        h = o_g * jnp.tanh(c)
        last = jnp.where((lens_j == t + 1)[:, None], h, last)
    p = np.array(sorted(range(num_tweets), key=lambda i: lengths[i], reverse=True))
    used = last[p][p]
    handmade = (handmade_raw - jnp.asarray(MEANS)) / jnp.asarray(STDS)
    used = jnp.concatenate([used, handmade.astype(jnp.float32)], axis=1)
    F = HIDDEN_DIM + NUM_HANDMADE
    rows, off = [], 0
    for n in tweets_per_user:
        urf = used[off:off + n]; off += n
        rows.append(jnp.concatenate(
            [urf, jnp.zeros((MAX_USER_TWEETS - n, F), jnp.float32)], axis=0))
    batch = jnp.concatenate(rows, axis=0)
    out = jnp.dot(batch, params["lin_w"].T, precision=hp) + params["lin_b"]
    return out.reshape(len(tweets_per_user), -1, OUTPUT_DIM)


if __name__ == "__main__":
    key = jax.random.PRNGKey(0)
    num_users = 2
    tweets_per_user = [3, 2]
    num_tweets = sum(tweets_per_user)
    max_seq_len = 8
    lengths = [8, 3, 5, 6, 4]     # words per tweet

    (k_emb, k_hand, k_wih, k_whh, k_bih, k_bhh, k_lw, k_lb) = jax.random.split(key, 8)

    # synthetic embedded tweets (stand-in for word2vec `embed(...)`), zero-padded
    x = jax.random.normal(k_emb, (num_tweets, max_seq_len, EMBED_DIM), jnp.float32)
    t_idx = jnp.arange(max_seq_len)[None, :, None]
    x = jnp.where(t_idx < jnp.array(lengths)[:, None, None], x, 0.0)

    # LSTM params (PyTorch layout: weight_ih (4H,E), weight_hh (4H,H), biases (4H,))
    s = 1.0 / np.sqrt(HIDDEN_DIM)
    F = HIDDEN_DIM + NUM_HANDMADE
    sl = 1.0 / np.sqrt(F)
    params = {
        "w_ih": jax.random.uniform(k_wih, (4 * HIDDEN_DIM, EMBED_DIM), jnp.float32, -s, s),
        "w_hh": jax.random.uniform(k_whh, (4 * HIDDEN_DIM, HIDDEN_DIM), jnp.float32, -s, s),
        "b_ih": jax.random.uniform(k_bih, (4 * HIDDEN_DIM,), jnp.float32, -s, s),
        "b_hh": jax.random.uniform(k_bhh, (4 * HIDDEN_DIM,), jnp.float32, -s, s),
        "lin_w": jax.random.uniform(k_lw, (OUTPUT_DIM, F), jnp.float32, -sl, sl),
        "lin_b": jax.random.uniform(k_lb, (OUTPUT_DIM,), jnp.float32, -sl, sl),
    }

    # handmade features: [favorite_count, is_quote, retweeted_status is None, #entities]
    handmade_raw = jnp.stack([
        jnp.array([3., 0., 12., 1., 0.]),
        jnp.array([0., 1., 0., 0., 1.]),
        jnp.array([1., 1., 0., 1., 1.]),
        jnp.array([2., 5., 1., 3., 0.]),
    ], axis=1)

    out = tweet_feature_extractor_forward(x, lengths, handmade_raw,
                                          tweets_per_user, params)
    out = jax.block_until_ready(out)

    ref = reference_forward(x, lengths, handmade_raw, tweets_per_user, params)
    assert out.shape == (num_users, MAX_USER_TWEETS, OUTPUT_DIM)
    assert bool(jnp.all(jnp.isfinite(out)))
    # 10x tighter than before; the remaining slack covers MXU pass-count
    # differences between the Mosaic kernel and the XLA reference matmuls.
    np.testing.assert_allclose(np.asarray(out), np.asarray(ref),
                               rtol=2e-3, atol=2e-3)
    print("KERNEL_OK")
</pallas_src>

<mosaic_0001>
module attributes {stable_mosaic.version = 11 : i64} {
  func.func @lstm_linear_kernel(%arg0: i32, %arg1: memref<1xi32, #tpu.memory_space<smem>>, %arg2: memref<8x8x16xf32, #tpu.memory_space<vmem>>, %arg3: memref<8x1xi32, #tpu.memory_space<vmem>>, %arg4: memref<16x128xf32, #tpu.memory_space<vmem>>, %arg5: memref<32x128xf32, #tpu.memory_space<vmem>>, %arg6: memref<1x128xf32, #tpu.memory_space<vmem>>, %arg7: memref<32x8xf32, #tpu.memory_space<vmem>>, %arg8: memref<8x8xf32, #tpu.memory_space<vmem>>, %arg9: memref<8x8xf32, #tpu.memory_space<vmem>>, %arg10: memref<8x8x128xf32, #tpu.memory_space<vmem>>, %arg11: memref<8x32xf32, #tpu.memory_space<vmem>>, %arg12: memref<8x32xf32, #tpu.memory_space<vmem>>, %arg13: memref<8x32xf32, #tpu.memory_space<vmem>>) attributes {dimension_semantics = [#tpu.dimension_semantics<parallel>], iteration_bounds = array<i64: 1>, scalar_prefetch = 1 : i64, scratch_operands = 4 : i64, tpu.core_type = #tpu.core_type<tc>, window_params = [{transform_indices = @transform_0, window_bounds = array<i64: 8, 8, 16>}, {transform_indices = @transform_1, window_bounds = array<i64: 8, 1>}, {pipeline_mode = #tpu.pipeline_mode<synchronous>, transform_indices = @transform_2, window_bounds = array<i64: 16, 128>}, {pipeline_mode = #tpu.pipeline_mode<synchronous>, transform_indices = @transform_3, window_bounds = array<i64: 32, 128>}, {pipeline_mode = #tpu.pipeline_mode<synchronous>, transform_indices = @transform_4, window_bounds = array<i64: 1, 128>}, {pipeline_mode = #tpu.pipeline_mode<synchronous>, transform_indices = @transform_5, window_bounds = array<i64: 32, 8>}, {transform_indices = @transform_6, window_bounds = array<i64: 8, 8>}, {transform_indices = @transform_7, window_bounds = array<i64: 8, 8>}]} {
    %c0 = arith.constant 0 : index
    %c0_0 = arith.constant 0 : index
    %c0_1 = arith.constant 0 : index
    %0 = vector.load %arg2[%c0, %c0_0, %c0_1] : memref<8x8x16xf32, #tpu.memory_space<vmem>>, vector<8x8x16xf32>
    %1 = vector.shape_cast %0 : vector<8x8x16xf32> to vector<64x16xf32>
    %c0_2 = arith.constant 0 : index
    %c0_3 = arith.constant 0 : index
    %2 = vector.load %arg4[%c0_2, %c0_3] : memref<16x128xf32, #tpu.memory_space<vmem>>, vector<16x128xf32>
    %cst = arith.constant dense<0.000000e+00> : vector<64x128xf32>
    %3 = tpu.matmul %1, %2, %cst {dimension_numbers = #tpu.dot_dimension_numbers<[1], [0], [0], [1], [0, 0, 1, 1], [], []>} : vector<64x16xf32>, vector<16x128xf32>, vector<64x128xf32> -> vector<64x128xf32>
    %c0_4 = arith.constant 0 : index
    %c0_5 = arith.constant 0 : index
    %4 = vector.load %arg6[%c0_4, %c0_5] : memref<1x128xf32, #tpu.memory_space<vmem>>, vector<1x128xf32>
    %5 = vector.broadcast %4 : vector<1x128xf32> to vector<64x128xf32>
    %6 = arith.addf %3, %5 : vector<64x128xf32>
    %7 = vector.shape_cast %6 : vector<64x128xf32> to vector<8x8x128xf32>
    %c0_6 = arith.constant 0 : index
    %c0_7 = arith.constant 0 : index
    %c0_8 = arith.constant 0 : index
    %8 = vector.load %arg10[%c0_6, %c0_7, %c0_8] : memref<8x8x128xf32, #tpu.memory_space<vmem>>, vector<8x8x128xf32>
    tpu.vector_store %arg10[%c0_6, %c0_7, %c0_8], %7 {strides = array<i32>} : memref<8x8x128xf32, #tpu.memory_space<vmem>>, vector<8x8x128xf32>,
    %cst_9 = arith.constant 0.000000e+00 : f32
    %9 = vector.broadcast %cst_9 : f32 to vector<8x32xf32>
    %c0_10 = arith.constant 0 : index
    %c0_11 = arith.constant 0 : index
    %10 = vector.load %arg11[%c0_10, %c0_11] : memref<8x32xf32, #tpu.memory_space<vmem>>, vector<8x32xf32>
    tpu.vector_store %arg11[%c0_10, %c0_11], %9 {strides = array<i32>} : memref<8x32xf32, #tpu.memory_space<vmem>>, vector<8x32xf32>,
    %cst_12 = arith.constant 0.000000e+00 : f32
    %11 = vector.broadcast %cst_12 : f32 to vector<8x32xf32>
    %c0_13 = arith.constant 0 : index
    %c0_14 = arith.constant 0 : index
    %12 = vector.load %arg12[%c0_13, %c0_14] : memref<8x32xf32, #tpu.memory_space<vmem>>, vector<8x32xf32>
    tpu.vector_store %arg12[%c0_13, %c0_14], %11 {strides = array<i32>} : memref<8x32xf32, #tpu.memory_space<vmem>>, vector<8x32xf32>,
    %cst_15 = arith.constant 0.000000e+00 : f32
    %13 = vector.broadcast %cst_15 : f32 to vector<8x32xf32>
    %c0_16 = arith.constant 0 : index
    %c0_17 = arith.constant 0 : index
    %14 = vector.load %arg13[%c0_16, %c0_17] : memref<8x32xf32, #tpu.memory_space<vmem>>, vector<8x32xf32>
    tpu.vector_store %arg13[%c0_16, %c0_17], %13 {strides = array<i32>} : memref<8x32xf32, #tpu.memory_space<vmem>>, vector<8x32xf32>,
    %15 = tpu.iota {dimensions = array<i32: 1>} : vector<8x128xi32>
    %c64_i32 = arith.constant 64 : i32
    %16 = vector.broadcast %c64_i32 : i32 to vector<8x128xi32>
    %17 = arith.cmpi sge, %15, %16 : vector<8x128xi32>
    %c96_i32 = arith.constant 96 : i32
    %18 = vector.broadcast %c96_i32 : i32 to vector<8x128xi32>
    %19 = arith.cmpi slt, %15, %18 : vector<8x128xi32>
    %20 = arith.andi %17, %19 : vector<8x128xi1>
    %c0_18 = arith.constant 0 : index
    %c0_19 = arith.constant 0 : index
    %21 = vector.load %arg3[%c0_18, %c0_19] : memref<8x1xi32, #tpu.memory_space<vmem>>, vector<8x1xi32>
    %22 = vector.shape_cast %21 : vector<8x1xi32> to vector<8x1xi32>
    %23 = vector.broadcast %22 : vector<8x1xi32> to vector<8x32xi32>
    %24 = arith.index_cast %arg0 : i32 to index
    %25 = memref.load %arg1[%24] : memref<1xi32, #tpu.memory_space<smem>>
    %c0_i32 = arith.constant 0 : i32
    %26 = arith.subi %25, %c0_i32 : i32
    %c1_i32 = arith.constant 1 : i32
    %c1_i32_20 = arith.constant 1 : i32
    %27 = arith.subi %c1_i32, %c1_i32_20 : i32
    %28 = arith.addi %26, %27 : i32
    %c1_i32_21 = arith.constant 1 : i32
    %29 = arith.divsi %28, %c1_i32_21 : i32
    %c1_i32_22 = arith.constant 1 : i32
    %c0_i32_23 = arith.constant 0 : i32
    %c0_i32_24 = arith.constant 0 : i32
    %30 = arith.subi %29, %c0_i32_24 : i32
    %31 = arith.addi %c0_i32_24, %30 : i32
    %c1_i32_25 = arith.constant 1 : i32
    scf.for %arg14 = %c0_i32_24 to %31 step %c1_i32_25  : i32 {
      %38 = arith.muli %arg14, %c1_i32_22 : i32
      %39 = arith.addi %c0_i32_23, %38 : i32
      %c0_35 = arith.constant 0 : index
      %c0_36 = arith.constant 0 : index
      %40 = vector.load %arg11[%c0_35, %c0_36] : memref<8x32xf32, #tpu.memory_space<vmem>>, vector<8x32xf32>
      %c0_37 = arith.constant 0 : index
      %c0_38 = arith.constant 0 : index
      %41 = vector.load %arg5[%c0_37, %c0_38] : memref<32x128xf32, #tpu.memory_space<vmem>>, vector<32x128xf32>
      %cst_39 = arith.constant dense<0.000000e+00> : vector<8x128xf32>
      %42 = tpu.matmul %40, %41, %cst_39 {dimension_numbers = #tpu.dot_dimension_numbers<[1], [0], [0], [1], [0, 0, 1, 1], [], []>} : vector<8x32xf32>, vector<32x128xf32>, vector<8x128xf32> -> vector<8x128xf32>
      %43 = arith.index_cast %39 : i32 to index
      %c0_40 = arith.constant 0 : index
      %c0_41 = arith.constant 0 : index
      %44 = vector.load %arg10[%43, %c0_40, %c0_41] : memref<8x8x128xf32, #tpu.memory_space<vmem>>, vector<1x8x128xf32>
      %45 = vector.shape_cast %44 : vector<1x8x128xf32> to vector<8x128xf32>
      %46 = arith.addf %42, %45 : vector<8x128xf32>
      %47 = math.tanh %46 : vector<8x128xf32>
      %cst_42 = arith.constant 5.000000e-01 : f32
      %48 = vector.broadcast %cst_42 : f32 to vector<8x128xf32>
      %49 = arith.mulf %48, %47 : vector<8x128xf32>
      %cst_43 = arith.constant 5.000000e-01 : f32
      %50 = vector.broadcast %cst_43 : f32 to vector<8x128xf32>
      %51 = arith.addf %49, %50 : vector<8x128xf32>
      %52 = arith.select %20, %47, %51 : vector<8x128xi1>, vector<8x128xf32>
      %53 = vector.extract_strided_slice %52 {offsets = [0, 0], sizes = [8, 32], strides = [1, 1]} : vector<8x128xf32> to vector<8x32xf32>
      %54 = vector.extract_strided_slice %52 {offsets = [0, 32], sizes = [8, 32], strides = [1, 1]} : vector<8x128xf32> to vector<8x32xf32>
      %55 = vector.extract_strided_slice %52 {offsets = [0, 64], sizes = [8, 32], strides = [1, 1]} : vector<8x128xf32> to vector<8x32xf32>
      %56 = vector.extract_strided_slice %52 {offsets = [0, 96], sizes = [8, 32], strides = [1, 1]} : vector<8x128xf32> to vector<8x32xf32>
      %c0_44 = arith.constant 0 : index
      %c0_45 = arith.constant 0 : index
      %57 = vector.load %arg12[%c0_44, %c0_45] : memref<8x32xf32, #tpu.memory_space<vmem>>, vector<8x32xf32>
      %58 = arith.mulf %54, %57 : vector<8x32xf32>
      %59 = arith.mulf %53, %55 : vector<8x32xf32>
      %60 = arith.addf %58, %59 : vector<8x32xf32>
      %61 = math.tanh %60 : vector<8x32xf32>
      %62 = arith.mulf %56, %61 : vector<8x32xf32>
      %c0_46 = arith.constant 0 : index
      %c0_47 = arith.constant 0 : index
      %63 = vector.load %arg12[%c0_46, %c0_47] : memref<8x32xf32, #tpu.memory_space<vmem>>, vector<8x32xf32>
      tpu.vector_store %arg12[%c0_46, %c0_47], %60 {strides = array<i32>} : memref<8x32xf32, #tpu.memory_space<vmem>>, vector<8x32xf32>,
      %c0_48 = arith.constant 0 : index
      %c0_49 = arith.constant 0 : index
      %64 = vector.load %arg11[%c0_48, %c0_49] : memref<8x32xf32, #tpu.memory_space<vmem>>, vector<8x32xf32>
      tpu.vector_store %arg11[%c0_48, %c0_49], %62 {strides = array<i32>} : memref<8x32xf32, #tpu.memory_space<vmem>>, vector<8x32xf32>,
      %c1_i32_50 = arith.constant 1 : i32
      %65 = arith.addi %39, %c1_i32_50 : i32
      %66 = vector.broadcast %65 : i32 to vector<8x32xi32>
      %67 = arith.cmpi eq, %23, %66 : vector<8x32xi32>
      %c0_51 = arith.constant 0 : index
      %c0_52 = arith.constant 0 : index
      %68 = vector.load %arg13[%c0_51, %c0_52] : memref<8x32xf32, #tpu.memory_space<vmem>>, vector<8x32xf32>
      %69 = arith.select %67, %62, %68 : vector<8x32xi1>, vector<8x32xf32>
      %c0_53 = arith.constant 0 : index
      %c0_54 = arith.constant 0 : index
      %70 = vector.load %arg13[%c0_53, %c0_54] : memref<8x32xf32, #tpu.memory_space<vmem>>, vector<8x32xf32>
      tpu.vector_store %arg13[%c0_53, %c0_54], %69 {strides = array<i32>} : memref<8x32xf32, #tpu.memory_space<vmem>>, vector<8x32xf32>,
    }
    %c0_26 = arith.constant 0 : index
    %c0_27 = arith.constant 0 : index
    %32 = vector.load %arg13[%c0_26, %c0_27] : memref<8x32xf32, #tpu.memory_space<vmem>>, vector<8x32xf32>
    %c0_28 = arith.constant 0 : index
    %c0_29 = arith.constant 0 : index
    %33 = vector.load %arg7[%c0_28, %c0_29] : memref<32x8xf32, #tpu.memory_space<vmem>>, vector<32x8xf32>
    %cst_30 = arith.constant dense<0.000000e+00> : vector<8x8xf32>
    %34 = tpu.matmul %32, %33, %cst_30 {dimension_numbers = #tpu.dot_dimension_numbers<[1], [0], [0], [1], [0, 0, 1, 1], [], []>} : vector<8x32xf32>, vector<32x8xf32>, vector<8x8xf32> -> vector<8x8xf32>
    %c0_31 = arith.constant 0 : index
    %c0_32 = arith.constant 0 : index
    %35 = vector.load %arg8[%c0_31, %c0_32] : memref<8x8xf32, #tpu.memory_space<vmem>>, vector<8x8xf32>
    %36 = arith.addf %34, %35 : vector<8x8xf32>
    %c0_33 = arith.constant 0 : index
    %c0_34 = arith.constant 0 : index
    %37 = vector.load %arg9[%c0_33, %c0_34] : memref<8x8xf32, #tpu.memory_space<vmem>>, vector<8x8xf32>
    tpu.vector_store %arg9[%c0_33, %c0_34], %36 {strides = array<i32>} : memref<8x8xf32, #tpu.memory_space<vmem>>, vector<8x8xf32>,
    return
  }
  func.func @transform_0(%arg0: i32, %arg1: memref<1xi32, #tpu.memory_space<smem>>) -> (i32, i32, i32) {
    %c0_i32 = arith.constant 0 : i32
    %c0_i32_0 = arith.constant 0 : i32
    %c0_i32_1 = arith.constant 0 : i32
    return %c0_i32, %arg0, %c0_i32_0 : i32, i32, i32
  }
  func.func @transform_1(%arg0: i32, %arg1: memref<1xi32, #tpu.memory_space<smem>>) -> (i32, i32) {
    %c0_i32 = arith.constant 0 : i32
    %c0_i32_0 = arith.constant 0 : i32
    return %arg0, %c0_i32 : i32, i32
  }
  func.func @transform_2(%arg0: i32, %arg1: memref<1xi32, #tpu.memory_space<smem>>) -> (i32, i32) {
    %c0_i32 = arith.constant 0 : i32
    %c0_i32_0 = arith.constant 0 : i32
    %c0_i32_1 = arith.constant 0 : i32
    return %c0_i32, %c0_i32_0 : i32, i32
  }
  func.func @transform_3(%arg0: i32, %arg1: memref<1xi32, #tpu.memory_space<smem>>) -> (i32, i32) {
    %c0_i32 = arith.constant 0 : i32
    %c0_i32_0 = arith.constant 0 : i32
    %c0_i32_1 = arith.constant 0 : i32
    return %c0_i32, %c0_i32_0 : i32, i32
  }
  func.func @transform_4(%arg0: i32, %arg1: memref<1xi32, #tpu.memory_space<smem>>) -> (i32, i32) {
    %c0_i32 = arith.constant 0 : i32
    %c0_i32_0 = arith.constant 0 : i32
    %c0_i32_1 = arith.constant 0 : i32
    return %c0_i32, %c0_i32_0 : i32, i32
  }
  func.func @transform_5(%arg0: i32, %arg1: memref<1xi32, #tpu.memory_space<smem>>) -> (i32, i32) {
    %c0_i32 = arith.constant 0 : i32
    %c0_i32_0 = arith.constant 0 : i32
    %c0_i32_1 = arith.constant 0 : i32
    return %c0_i32, %c0_i32_0 : i32, i32
  }
  func.func @transform_6(%arg0: i32, %arg1: memref<1xi32, #tpu.memory_space<smem>>) -> (i32, i32) {
    %c0_i32 = arith.constant 0 : i32
    %c0_i32_0 = arith.constant 0 : i32
    return %arg0, %c0_i32 : i32, i32
  }
  func.func @transform_7(%arg0: i32, %arg1: memref<1xi32, #tpu.memory_space<smem>>) -> (i32, i32) {
    %c0_i32 = arith.constant 0 : i32
    %c0_i32_0 = arith.constant 0 : i32
    return %arg0, %c0_i32 : i32, i32
  }
}

</mosaic_0001>

<llo_original>
// kernel: tpu_custom_call.1
$region0: #{tpu_custom_call.1}
  #allocation0 [shape = 'u32[]', space=smem, size = 0x4, offset = 0x4, fixed_abs, tag = 'smem constant byte address 0x4 - core index']
  #allocation1 [shape = 'u32[144,128]{1,0:T(1,128)}', space=vmem, size = 0x12000, scoped, tag = 'internal scratch']
  #allocation2 [shape = 'f32[8,8,128]{2,1,0:T(8,128)}', space=vmem, size = 0x8000, scoped, tag = 'scratch operand']
  #allocation3 [shape = 'f32[8,32]{1,0:T(8,128)}', space=vmem, size = 0x1000, scoped, tag = 'scratch operand']
  #allocation4 [shape = 'f32[8,32]{1,0:T(8,128)}', space=vmem, size = 0x1000, scoped, tag = 'scratch operand']
  #allocation5 [shape = 'f32[8,32]{1,0:T(8,128)}', space=vmem, size = 0x1000, scoped, tag = 'scratch operand']
  #allocation6 [shape = 's32[1]{0}', space=sflag, size = 0x4, scoped, tag = 'scoped memory for tpu_custom_call.1']
  #allocation7 [shape = 's32[1]{0:T(128)S(6)}', space=smem, size = 0x200, scoped, tag = 'prefetched SMEM operand 0']
  %s0 = inlined_call_operand.<no memory space> [shape: s32[1], index: 0, kind: input, shape index: {}]
  %s1 = inlined_call_operand.hbm [shape: f32[8,8,16], index: 1, kind: input, shape index: {}]
  %s2 = inlined_call_operand.vmem [shape: s32[8,1], index: 2, kind: input, shape index: {}]
  %s3 = inlined_call_operand.vmem [shape: f32[16,128], index: 3, kind: input, shape index: {}]
  %s4 = inlined_call_operand.vmem [shape: f32[32,128], index: 4, kind: input, shape index: {}]
  %s5 = inlined_call_operand.vmem [shape: f32[1,128], index: 5, kind: input, shape index: {}]
  %s6 = inlined_call_operand.vmem [shape: f32[32,8], index: 6, kind: input, shape index: {}]
  %s7 = inlined_call_operand.vmem [shape: f32[8,8], index: 7, kind: input, shape index: {}]
  %s8 = inlined_call_operand.hbm [shape: f32[8,8], index: 8, kind: output, shape index: {}]
  %s9 = sld [smem:[#allocation0]]
  $region49: #{tpu_custom_call.1} parent=0
    _
  %s11 = ssub.s32 1, %s9
  %s12 = scalar_select 0, %s11, %s9
  %13 = sst [smem:[#allocation7]] %s0
  $region1: #{tpu_custom_call.1} parent=0
    #allocation8 [shape = 'u8[32768]{0}', space=vmem, size = 0x8000, scoped, tag = 'input window, operand 1, single buffered']
    #allocation9 [shape = 's32[1]{0}', space=sflag, size = 0x4, scoped, tag = 'scoped memory for tpu_custom_call.1']
    #allocation10 [shape = 's32[1]{0}', space=sflag, size = 0x4, scoped, tag = 'scoped memory for tpu_custom_call.1']
    #allocation11 [shape = 'u8[4096]{0}', space=vmem, size = 0x1000, scoped, tag = 'output window, operand 0, single buffered']
    %14 = vsyncpa [#allocation9], 0
    %15 = vsyncpa [#allocation10], 0
    // Predicated region
    $region2: #{tpu_custom_call.1} parent=1 // pred_check
      _
    $region3: #{tpu_custom_call.1} parent=1 // pred_check_branch
      %17 = sbr.rel (0) target = $region5
    $region4: #{tpu_custom_call.1} parent=1 // pred_region
      %s19 = ssub.s32 1024, 1024
      %20 = vsyncadd [#allocation9], %s19
      %s21 = sshll.u32 [#allocation8], 4
      %s22 = int_to_ptr.vmem [resolvable:$true] %s21
      %27 = dma.hbm_to_vmem [thread:$0]  %s1, 1024, %s22, [#allocation9], 128, 128, 8
    $region5: #{tpu_custom_call.1} parent=1 // pred_fallthru
      _
    // Predicated region
    $region6: #{tpu_custom_call.1} parent=1 // pred_check
      _
    $region7: #{tpu_custom_call.1} parent=1 // pred_check_branch
      %29 = sbr.rel (0) target = $region9
    $region8: #{tpu_custom_call.1} parent=1 // pred_region
      _
    $region9: #{tpu_custom_call.1} parent=1 // pred_fallthru
      _
    // Predicated region
    $region10: #{tpu_custom_call.1} parent=1 // pred_check
      _
    $region11: #{tpu_custom_call.1} parent=1 // pred_check_branch
      %31 = sbr.rel (0) target = $region13
    $region12: #{tpu_custom_call.1} parent=1 // pred_region
      _
    $region13: #{tpu_custom_call.1} parent=1 // pred_fallthru
      _
    // Predicated region
    $region14: #{tpu_custom_call.1} parent=1 // pred_check
      _
    $region15: #{tpu_custom_call.1} parent=1 // pred_check_branch
      %33 = sbr.rel (0) target = $region17
    $region16: #{tpu_custom_call.1} parent=1 // pred_region
      _
    $region17: #{tpu_custom_call.1} parent=1 // pred_fallthru
      _
    // Predicated region
    $region18: #{tpu_custom_call.1} parent=1 // pred_check
      _
    $region19: #{tpu_custom_call.1} parent=1 // pred_check_branch
      %35 = sbr.rel (0) target = $region21
    $region20: #{tpu_custom_call.1} parent=1 // pred_region
      _
    $region21: #{tpu_custom_call.1} parent=1 // pred_fallthru
      _
    // Predicated region
    $region22: #{tpu_custom_call.1} parent=1 // pred_check
      _
    $region23: #{tpu_custom_call.1} parent=1 // pred_check_branch
      %37 = sbr.rel (0) target = $region25
    $region24: #{tpu_custom_call.1} parent=1 // pred_region
      _
    $region25: #{tpu_custom_call.1} parent=1 // pred_fallthru
      _
    // Predicated region
    $region26: #{tpu_custom_call.1} parent=1 // pred_check
      _
    $region27: #{tpu_custom_call.1} parent=1 // pred_check_branch
      %39 = sbr.rel (0) target = $region29
    $region28: #{tpu_custom_call.1} parent=1 // pred_region
      _
    $region29: #{tpu_custom_call.1} parent=1 // pred_fallthru
      _
    // Predicated region
    $region30: #{tpu_custom_call.1} parent=1 // pred_check
      _
    $region31: #{tpu_custom_call.1} parent=1 // pred_check_branch
      %41 = sbr.rel (0) target = $region33
    $region32: #{tpu_custom_call.1} parent=1 // pred_region
      %42 = dma.done [#allocation9], 1024
    $region33: #{tpu_custom_call.1} parent=1 // pred_fallthru
      _
    %v43 = vld [vmem:[#allocation8] sm:$0xff]
    %v44 = vld [vmem:[#allocation8 + $0x8] sm:$0xff]
    %v45 = vld [vmem:[#allocation8 + $0x10] sm:$0xff]
    %v46 = vld [vmem:[#allocation8 + $0x18] sm:$0xff]
    %v47 = vld [vmem:[#allocation8 + $0x20] sm:$0xff]
    %v48 = vld [vmem:[#allocation8 + $0x28] sm:$0xff]
    %v49 = vld [vmem:[#allocation8 + $0x30] sm:$0xff]
    %v50 = vld [vmem:[#allocation8 + $0x38] sm:$0xff]
    %v51 = vld [vmem:[%s3] sm:$0xff]
    %v52 = vld [vmem:[%s3 + $0x8] sm:$0xff]
    %v53 = vld [vmem:[%s5] sm:$0x1]
    %v55 = vlaneseq
    %v56 = vshrl.u32 %v55, 7
    %v57 = vsub.s32 0, %v56
    %v58 = vrot.slane %v53, %v57
    %vm60 = vcmask 130048
    %v62 = vsel %vm60, %v43, 0
    %v65 = vsel %vm60, %v44, 0
    %v68 = vsel %vm60, %v45, 0
    %v71 = vsel %vm60, %v46, 0
    %v74 = vsel %vm60, %v47, 0
    %v77 = vsel %vm60, %v48, 0
    %v80 = vsel %vm60, %v49, 0
    %v83 = vsel %vm60, %v50, 0
    %85 = vmatprep.subr.mxu0 0.0
    %86 = vmatpush1.msra.mxu0 %v51
    %87 = vmatprep.subr.mxu0 0.0
    %88 = vmatpush1.msra.mxu0 %v52
    %89 = vmatprep.subr.mxu0 0.0
    %90 = vmatpush1.msra.mxu0 0.0
    %91 = vmatprep.subr.mxu0 0.0
    %92 = vmatpush1.msra.mxu0 0.0
    %93 = vmatprep.subr.mxu0 0.0
    %94 = vmatpush1.msra.mxu0 0.0
    %95 = vmatprep.subr.mxu0 0.0
    %96 = vmatpush1.msra.mxu0 0.0
    %97 = vmatprep.subr.mxu0 0.0
    %98 = vmatpush1.msra.mxu0 0.0
    %99 = vmatprep.subr.mxu0 0.0
    %100 = vmatpush1.msra.mxu0 0.0
    %101 = vmatprep.subr.mxu0 0.0
    %102 = vmatpush1.msra.mxu0 0.0
    %103 = vmatprep.subr.mxu0 0.0
    %104 = vmatpush1.msra.mxu0 0.0
    %105 = vmatprep.subr.mxu0 0.0
    %106 = vmatpush1.msra.mxu0 0.0
    %107 = vmatprep.subr.mxu0 0.0
    %108 = vmatpush1.msra.mxu0 0.0
    %109 = vmatprep.subr.mxu0 0.0
    %110 = vmatpush1.msra.mxu0 0.0
    %111 = vmatprep.subr.mxu0 0.0
    %112 = vmatpush1.msra.mxu0 0.0
    %113 = vmatprep.subr.mxu0 0.0
    %114 = vmatpush1.msra.mxu0 0.0
    %115 = vmatprep.subr.mxu0 0.0
    %116 = vmatpush1.msra.mxu0 0.0
    %117 = vmatprep.subr.mxu0 0.0
    %118 = vmatpush1.msra.mxu0 0.0
    %119 = vmatprep.subr.mxu0 0.0
    %120 = vmatpush1.msra.mxu0 0.0
    %121 = vmatprep.subr.mxu0 0.0
    %122 = vmatpush1.msra.mxu0 0.0
    %123 = vmatprep.subr.mxu0 0.0
    %124 = vmatpush1.msra.mxu0 0.0
    %125 = vmatprep.subr.mxu0 0.0
    %126 = vmatpush1.msra.mxu0 0.0
    %127 = vmatprep.subr.mxu0 0.0
    %128 = vmatpush1.msra.mxu0 0.0
    %129 = vmatprep.subr.mxu0 0.0
    %130 = vmatpush1.msra.mxu0 0.0
    %131 = vmatprep.subr.mxu0 0.0
    %132 = vmatpush1.msra.mxu0 0.0
    %133 = vmatprep.subr.mxu0 0.0
    %134 = vmatpush1.msra.mxu0 0.0
    %135 = vmatprep.subr.mxu0 0.0
    %136 = vmatpush1.msra.mxu0 0.0
    %137 = vmatprep.subr.mxu0 0.0
    %138 = vmatpush1.msra.mxu0 0.0
    %139 = vmatprep.subr.mxu0 0.0
    %140 = vmatpush1.msra.mxu0 0.0
    %141 = vmatprep.subr.mxu0 0.0
    %142 = vmatpush1.msra.mxu0 0.0
    %143 = vmatprep.subr.mxu0 0.0
    %144 = vmatpush1.msra.mxu0 0.0
    %145 = vmatprep.subr.mxu0 0.0
    %146 = vmatpush1.msra.mxu0 0.0
    %147 = vmatprep.subr.mxu0 0.0
    %148 = vmatpush1.msra.mxu0 0.0
    %149 = vmatprep.mubr.f32.mxu0 0.0
    %150 = vmatmul.mubr.f32.gmra.mrb[0].mxu0 %v62
    %v151 = vpop.f32.mrb[0].mxu0
    %v152 = vadd.f32 %v58, %v151
    %v153 = vpop.f32.mrb[0].mxu0
    %154 = vmatprep.mubr.f32.mxu0 0.0
    %155 = vmatmul.mubr.f32.gmra.mrb[0].mxu0 %v65
    %v156 = vpop.f32.mrb[0].mxu0
    %v157 = vadd.f32 %v58, %v156
    %v158 = vpop.f32.mrb[0].mxu0
    %159 = vmatprep.mubr.f32.mxu0 0.0
    %160 = vmatmul.mubr.f32.gmra.mrb[0].mxu0 %v68
    %v161 = vpop.f32.mrb[0].mxu0
    %v162 = vadd.f32 %v58, %v161
    %v163 = vpop.f32.mrb[0].mxu0
    %164 = vmatprep.mubr.f32.mxu0 0.0
    %165 = vmatmul.mubr.f32.gmra.mrb[0].mxu0 %v71
    %v166 = vpop.f32.mrb[0].mxu0
    %v167 = vadd.f32 %v58, %v166
    %v168 = vpop.f32.mrb[0].mxu0
    %169 = vmatprep.mubr.f32.mxu0 0.0
    %170 = vmatmul.mubr.f32.gmra.mrb[0].mxu0 %v74
    %v171 = vpop.f32.mrb[0].mxu0
    %v172 = vadd.f32 %v58, %v171
    %v173 = vpop.f32.mrb[0].mxu0
    %174 = vmatprep.mubr.f32.mxu0 0.0
    %175 = vmatmul.mubr.f32.gmra.mrb[0].mxu0 %v77
    %v176 = vpop.f32.mrb[0].mxu0
    %v177 = vadd.f32 %v58, %v176
    %v178 = vpop.f32.mrb[0].mxu0
    %179 = vmatprep.mubr.f32.mxu0 0.0
    %180 = vmatmul.mubr.f32.gmra.mrb[0].mxu0 %v80
    %v181 = vpop.f32.mrb[0].mxu0
    %v182 = vadd.f32 %v58, %v181
    %v183 = vpop.f32.mrb[0].mxu0
    %184 = vmatprep.mubr.f32.mxu0 0.0
    %185 = vmatmul.mubr.f32.gmra.mrb[0].mxu0 %v83
    %v186 = vpop.f32.mrb[0].mxu0
    %v187 = vadd.f32 %v58, %v186
    %v188 = vpop.f32.mrb[0].mxu0
    %189 = vdwg.mxu0
    %190 = vst [vmem:[#allocation2] sm:$0xff] %v152
    %191 = vst [vmem:[#allocation2 + $0x8] sm:$0xff] %v157
    %192 = vst [vmem:[#allocation2 + $0x10] sm:$0xff] %v162
    %193 = vst [vmem:[#allocation2 + $0x18] sm:$0xff] %v167
    %194 = vst [vmem:[#allocation2 + $0x20] sm:$0xff] %v172
    %195 = vst [vmem:[#allocation2 + $0x28] sm:$0xff] %v177
    %196 = vst [vmem:[#allocation2 + $0x30] sm:$0xff] %v182
    %197 = vst [vmem:[#allocation2 + $0x38] sm:$0xff] %v187
    %vm198 = vcmask 261120
    %199 = vst.msk [vmem:[#allocation3] sm:$0xff] %vm198, 0.0
    %200 = vst.msk [vmem:[#allocation4] sm:$0xff] %vm198, 0.0
    %201 = vst.msk [vmem:[#allocation5] sm:$0xff] %vm198, 0.0
    %v202 = vlaneseq
    %v203 = vand.u32 %v202, 127
    %vm204 = vcmp.ge.s32.totalorder %v203, 64
    %vm205 = vcmp.lt.s32.totalorder %v203, 96
    %vm206 = vmand %vm204, %vm205
    %v207 = vld [vmem:[%s2] sm:$0xff]
    %208 = vset.pattern.permute.xlu0 0
    %209 = vperm.xlu0 %208, %v207
    %v210 = vpop.permute.xlu0 %209
    %s211 = sld [smem:[#allocation7]]
    // While loop
    $region34: #{tpu_custom_call.1} parent=1 // loop_pre_header
      _
    $region35: #{tpu_custom_call.1} parent=1 // loop_header
      %s213 = sphi 0, %s215
      %p214 = scmp.ge.s32.totalorder %s213, %s211
    $region36: #{tpu_custom_call.1} parent=1 // loop_header_branch
      %217 = sbr.rel (%p214) target = $region40
    $region37: #{tpu_custom_call.1} parent=1 // loop_body
      %v218 = vld [vmem:[#allocation3] sm:$0xff]
      %v219 = vld [vmem:[%s4] sm:$0xff]
      %v220 = vld [vmem:[%s4 + $0x8] sm:$0xff]
      %v221 = vld [vmem:[%s4 + $0x10] sm:$0xff]
      %v222 = vld [vmem:[%s4 + $0x18] sm:$0xff]
      %s223 = smul.u32 %s213, 8
      %s224 = scalar_lea.vmem [#allocation2], %s223
      %v225 = vld [vmem:[%s224] sm:$0xff]
      %v227 = vsel %vm198, %v218, 0
      %229 = vmatprep.subr.mxu0 0.0
      %230 = vmatpush1.msra.mxu0 %v219
      %231 = vmatprep.subr.mxu0 0.0
      %232 = vmatpush1.msra.mxu0 %v220
      %233 = vmatprep.subr.mxu0 0.0
      %234 = vmatpush1.msra.mxu0 %v221
      %235 = vmatprep.subr.mxu0 0.0
      %236 = vmatpush1.msra.mxu0 %v222
      %237 = vmatprep.subr.mxu0 0.0
      %238 = vmatpush1.msra.mxu0 0.0
      %239 = vmatprep.subr.mxu0 0.0
      %240 = vmatpush1.msra.mxu0 0.0
      %241 = vmatprep.subr.mxu0 0.0
      %242 = vmatpush1.msra.mxu0 0.0
      %243 = vmatprep.subr.mxu0 0.0
      %244 = vmatpush1.msra.mxu0 0.0
      %245 = vmatprep.subr.mxu0 0.0
      %246 = vmatpush1.msra.mxu0 0.0
      %247 = vmatprep.subr.mxu0 0.0
      %248 = vmatpush1.msra.mxu0 0.0
      %249 = vmatprep.subr.mxu0 0.0
      %250 = vmatpush1.msra.mxu0 0.0
      %251 = vmatprep.subr.mxu0 0.0
      %252 = vmatpush1.msra.mxu0 0.0
      %253 = vmatprep.subr.mxu0 0.0
      %254 = vmatpush1.msra.mxu0 0.0
      %255 = vmatprep.subr.mxu0 0.0
      %256 = vmatpush1.msra.mxu0 0.0
      %257 = vmatprep.subr.mxu0 0.0
      %258 = vmatpush1.msra.mxu0 0.0
      %259 = vmatprep.subr.mxu0 0.0
      %260 = vmatpush1.msra.mxu0 0.0
      %261 = vmatprep.subr.mxu0 0.0
      %262 = vmatpush1.msra.mxu0 0.0
      %263 = vmatprep.subr.mxu0 0.0
      %264 = vmatpush1.msra.mxu0 0.0
      %265 = vmatprep.subr.mxu0 0.0
      %266 = vmatpush1.msra.mxu0 0.0
      %267 = vmatprep.subr.mxu0 0.0
      %268 = vmatpush1.msra.mxu0 0.0
      %269 = vmatprep.subr.mxu0 0.0
      %270 = vmatpush1.msra.mxu0 0.0
      %271 = vmatprep.subr.mxu0 0.0
      %272 = vmatpush1.msra.mxu0 0.0
      %273 = vmatprep.subr.mxu0 0.0
      %274 = vmatpush1.msra.mxu0 0.0
      %275 = vmatprep.subr.mxu0 0.0
      %276 = vmatpush1.msra.mxu0 0.0
      %277 = vmatprep.subr.mxu0 0.0
      %278 = vmatpush1.msra.mxu0 0.0
      %279 = vmatprep.subr.mxu0 0.0
      %280 = vmatpush1.msra.mxu0 0.0
      %281 = vmatprep.subr.mxu0 0.0
      %282 = vmatpush1.msra.mxu0 0.0
      %283 = vmatprep.subr.mxu0 0.0
      %284 = vmatpush1.msra.mxu0 0.0
      %285 = vmatprep.subr.mxu0 0.0
      %286 = vmatpush1.msra.mxu0 0.0
      %287 = vmatprep.subr.mxu0 0.0
      %288 = vmatpush1.msra.mxu0 0.0
      %289 = vmatprep.subr.mxu0 0.0
      %290 = vmatpush1.msra.mxu0 0.0
      %291 = vmatprep.subr.mxu0 0.0
      %292 = vmatpush1.msra.mxu0 0.0
      %293 = vmatprep.mubr.f32.mxu0 0.0
      %294 = vmatmul.mubr.f32.gmra.mrb[0].mxu0 %v227
      %v295 = vpop.f32.mrb[0].mxu0
      %v296 = vadd.f32 %v225, %v295
      %v297 = vpop.f32.mrb[0].mxu0
      %298 = vdwg.mxu0
      %v299 = vtanh.pop %v296
      %v300 = vmul.f32 %v299, 0.5
      %v301 = vadd.f32 %v300, 0.5
      %v302 = vsel %vm206, %v299, %v301
      %v303 = vld [vmem:[#allocation4] sm:$0xff]
      %305 = vrot.lane.b32.xlu0 %v303, 32
      %v306 = vpop.permute.xlu0 %305
      %v308 = vmul.f32 %v302, %v306
      %310 = vrot.lane.b32.xlu0 %v302, 64
      %v311 = vpop.permute.xlu0 %310
      %v313 = vmul.f32 %v302, %v311
      %315 = vrot.lane.b32.xlu0 %v313, 32
      %v316 = vpop.permute.xlu0 %315
      %v318 = vadd.f32 %v308, %v316
      %v319 = vtanh.pop %v318
      %321 = vrot.lane.b32.xlu0 %v319, 64
      %v322 = vpop.permute.xlu0 %321
      %v324 = vmul.f32 %v302, %v322
      %326 = vrot.lane.b32.xlu0 %v318, 96
      %v327 = vpop.permute.xlu0 %326
      %329 = vst.msk [vmem:[#allocation4] sm:$0xff] %vm198, %v327
      %331 = vrot.lane.b32.xlu0 %v324, 32
      %v332 = vpop.permute.xlu0 %331
      %334 = vst.msk [vmem:[#allocation3] sm:$0xff] %vm198, %v332
      %s335 = sadd.s32 %s213, 1
      %v336 = vstv %s335
      %vm337 = vcmp.eq.s32.totalorder %v210, %v336
      %v338 = vld [vmem:[#allocation5] sm:$0xff]
      %340 = vrot.lane.b32.xlu0 %v338, 96
      %v341 = vpop.permute.xlu0 %340
      %v343 = vsel %vm337, %v324, %v341
      %345 = vrot.lane.b32.xlu0 %v343, 32
      %v346 = vpop.permute.xlu0 %345
      %348 = vst.msk [vmem:[#allocation5] sm:$0xff] %vm198, %v346
    $region38: #{tpu_custom_call.1} parent=1 // loop_footer
      %s215 = sadd.s32 %s213, 1
    $region39: #{tpu_custom_call.1} parent=1 // loop_footer_branch
      %212 = sbr.rel target = $region35
    $region40: #{tpu_custom_call.1} parent=1 // loop_exit
      _
    %v349 = vld [vmem:[#allocation5] sm:$0xff]
    %v350 = vld [vmem:[%s6] sm:$0xff]
    %v351 = vld [vmem:[%s6 + $0x8] sm:$0xff]
    %v352 = vld [vmem:[%s6 + $0x10] sm:$0xff]
    %v353 = vld [vmem:[%s6 + $0x18] sm:$0xff]
    %v354 = vld [vmem:[%s7] sm:$0xff]
    %v356 = vsel %vm198, %v349, 0
    %358 = vmatprep.subr.mxu0 0.0
    %359 = vmatpush1.msra.mxu0 %v350
    %360 = vmatprep.subr.mxu0 0.0
    %361 = vmatpush1.msra.mxu0 %v351
    %362 = vmatprep.subr.mxu0 0.0
    %363 = vmatpush1.msra.mxu0 %v352
    %364 = vmatprep.subr.mxu0 0.0
    %365 = vmatpush1.msra.mxu0 %v353
    %366 = vmatprep.subr.mxu0 0.0
    %367 = vmatpush1.msra.mxu0 0.0
    %368 = vmatprep.subr.mxu0 0.0
    %369 = vmatpush1.msra.mxu0 0.0
    %370 = vmatprep.subr.mxu0 0.0
    %371 = vmatpush1.msra.mxu0 0.0
    %372 = vmatprep.subr.mxu0 0.0
    %373 = vmatpush1.msra.mxu0 0.0
    %374 = vmatprep.subr.mxu0 0.0
    %375 = vmatpush1.msra.mxu0 0.0
    %376 = vmatprep.subr.mxu0 0.0
    %377 = vmatpush1.msra.mxu0 0.0
    %378 = vmatprep.subr.mxu0 0.0
    %379 = vmatpush1.msra.mxu0 0.0
    %380 = vmatprep.subr.mxu0 0.0
    %381 = vmatpush1.msra.mxu0 0.0
    %382 = vmatprep.subr.mxu0 0.0
    %383 = vmatpush1.msra.mxu0 0.0
    %384 = vmatprep.subr.mxu0 0.0
    %385 = vmatpush1.msra.mxu0 0.0
    %386 = vmatprep.subr.mxu0 0.0
    %387 = vmatpush1.msra.mxu0 0.0
    %388 = vmatprep.subr.mxu0 0.0
    %389 = vmatpush1.msra.mxu0 0.0
    %390 = vmatprep.subr.mxu0 0.0
    %391 = vmatpush1.msra.mxu0 0.0
    %392 = vmatprep.subr.mxu0 0.0
    %393 = vmatpush1.msra.mxu0 0.0
    %394 = vmatprep.subr.mxu0 0.0
    %395 = vmatpush1.msra.mxu0 0.0
    %396 = vmatprep.subr.mxu0 0.0
    %397 = vmatpush1.msra.mxu0 0.0
    %398 = vmatprep.subr.mxu0 0.0
    %399 = vmatpush1.msra.mxu0 0.0
    %400 = vmatprep.subr.mxu0 0.0
    %401 = vmatpush1.msra.mxu0 0.0
    %402 = vmatprep.subr.mxu0 0.0
    %403 = vmatpush1.msra.mxu0 0.0
    %404 = vmatprep.subr.mxu0 0.0
    %405 = vmatpush1.msra.mxu0 0.0
    %406 = vmatprep.subr.mxu0 0.0
    %407 = vmatpush1.msra.mxu0 0.0
    %408 = vmatprep.subr.mxu0 0.0
    %409 = vmatpush1.msra.mxu0 0.0
    %410 = vmatprep.subr.mxu0 0.0
    %411 = vmatpush1.msra.mxu0 0.0
    %412 = vmatprep.subr.mxu0 0.0
    %413 = vmatpush1.msra.mxu0 0.0
    %414 = vmatprep.subr.mxu0 0.0
    %415 = vmatpush1.msra.mxu0 0.0
    %416 = vmatprep.subr.mxu0 0.0
    %417 = vmatpush1.msra.mxu0 0.0
    %418 = vmatprep.subr.mxu0 0.0
    %419 = vmatpush1.msra.mxu0 0.0
    %420 = vmatprep.subr.mxu0 0.0
    %421 = vmatpush1.msra.mxu0 0.0
    %422 = vmatprep.mubr.f32.mxu0 0.0
    %423 = vmatmul.mubr.f32.gmra.mrb[0].mxu0 %v356
    %v424 = vpop.f32.mrb[0].mxu0
    %v425 = vadd.f32 %v354, %v424
    %v426 = vpop.f32.mrb[0].mxu0
    %427 = vdwg.mxu0
    %vm428 = vcmask 64512
    %429 = vst.msk [vmem:[#allocation11] sm:$0xff] %vm428, %v425
    // Predicated region
    $region41: #{tpu_custom_call.1} parent=1 // pred_check
      _
    $region42: #{tpu_custom_call.1} parent=1 // pred_check_branch
      %431 = sbr.rel (0) target = $region44
    $region43: #{tpu_custom_call.1} parent=1 // pred_region
      %s433 = ssub.s32 128, 128
      %434 = vsyncadd [#allocation10], %s433
      %s436 = sshll.u32 [#allocation11], 4
      %s437 = int_to_ptr.vmem [resolvable:$true] %s436
      %439 = dma.vmem_to_hbm [thread:$0]  %s437, 128, %s8, [#allocation10]
    $region44: #{tpu_custom_call.1} parent=1 // pred_fallthru
      _
    // Predicated region
    $region45: #{tpu_custom_call.1} parent=1 // pred_check
      _
    $region46: #{tpu_custom_call.1} parent=1 // pred_check_branch
      %441 = sbr.rel (0) target = $region48
    $region47: #{tpu_custom_call.1} parent=1 // pred_region
      %442 = dma.done [#allocation10], 128
    $region48: #{tpu_custom_call.1} parent=1 // pred_fallthru
      _
    %443 = vsyncpa [#allocation9], 1
    %444 = vsyncpa [#allocation10], 1

</llo_original>
